<compile_context>
chip_gen: v7x
topology: tpu7x:2x2x1
jax: 0.10.0
libtpu: 0.0.40
codegen_flags: <defaults>
</compile_context>

<pallas_src>
import functools
import math

import jax
import jax.numpy as jnp
from jax.experimental import pallas as pl
from jax.experimental.pallas import tpu as pltpu

_SQRT_2_OVER_PI = math.sqrt(2.0 / math.pi)


# ---------------------------------------------------------------------------
# Per-chip budget (VMEM capacity -> scoped limit + tile targets)
# ---------------------------------------------------------------------------
def _detect_vmem_capacity_bytes():
    try:
        info = pltpu.get_tpu_info()
        for attr in ("vmem_capacity_bytes", "vmem_bytes", "vmem_size_bytes"):
            val = getattr(info, attr, None)
            if val:
                return int(val)
    except Exception:
        pass
    return 64 * 1024 * 1024  # conservative default (v7x-sized)


_VMEM_CAP = _detect_vmem_capacity_bytes()
if _VMEM_CAP >= 100 * 1024 * 1024:          # v5e / v6e: 128 MiB physical VMEM
    _VMEM_LIMIT = 96 * 1024 * 1024
    _TM_TGT, _TN_TGT, _TK_TGT = 1024, 1024, 512
else:                                        # v7x: 64 MiB physical VMEM
    _VMEM_LIMIT = 48 * 1024 * 1024
    _TM_TGT, _TN_TGT, _TK_TGT = 512, 512, 512

_LN_ROWS_TGT = 1024
_ATTN_T_TILE = 256


# ---------------------------------------------------------------------------
# Tiling / padding helpers
# ---------------------------------------------------------------------------
def _round_up(x, m):
    return ((x + m - 1) // m) * m


def _tile_for(dim, target, align):
    """Pick (tile, padded_dim).  Never falls back to the full dimension for
    large non-divisible dims: if dim > target use an `align`-aligned tile and
    pad `dim` up to a multiple of it (zero padding handled by the wrappers)."""
    if dim <= target:
        return dim, dim
    tile = max(align, (target // align) * align)
    return tile, _round_up(dim, tile)


def _pad2d(x, rows, cols):
    pr, pc = rows - x.shape[0], cols - x.shape[1]
    if pr == 0 and pc == 0:
        return x
    return jnp.pad(x, ((0, pr), (0, pc)))


def _gelu_f32(x):
    # 0.5 * x * (1 + tanh(sqrt(2/pi) * (x + 0.044715 * x^3)))
    return 0.5 * x * (1.0 + jnp.tanh(_SQRT_2_OVER_PI * (x + 0.044715 * x * x * x)))


# ---------------------------------------------------------------------------
# Fused (multi-output) matmul: outs[i] = act(x @ W_i + b_i)
# ---------------------------------------------------------------------------
def _matmul_kernel(x_ref, *refs, n_out, has_bias, activation):
    w_refs = refs[:n_out]
    pos = n_out
    b_refs = refs[pos:pos + n_out] if has_bias else ()
    pos += n_out if has_bias else 0
    o_refs = refs[pos:pos + n_out]
    acc_refs = refs[pos + n_out:]

    kk = pl.program_id(2)

    @pl.when(kk == 0)
    def _():
        for acc in acc_refs:
            acc[...] = jnp.zeros_like(acc)

    x = x_ref[...]
    for w, acc in zip(w_refs, acc_refs):
        acc[...] += jnp.dot(x, w[...], preferred_element_type=jnp.float32)

    @pl.when(kk == pl.num_programs(2) - 1)
    def _():
        for i in range(n_out):
            acc = acc_refs[i][...]
            if has_bias:
                acc = acc + b_refs[i][...].astype(jnp.float32)
            if activation == "gelu":
                acc = _gelu_f32(acc)
            o_refs[i][...] = acc.astype(o_refs[i].dtype)


def fused_matmul_pallas(x, weights, biases=None, activation=None):
    """All weights share shape (K, N); x is (M, K); returns tuple of (M, N)."""
    M, K = x.shape
    N = weights[0].shape[1]
    n_out = len(weights)
    has_bias = biases is not None

    tm, Mp = _tile_for(M, _TM_TGT, 8)
    tn, Np = _tile_for(N, _TN_TGT, 128)
    tk, Kp = _tile_for(K, _TK_TGT, 128)

    xp = _pad2d(x, Mp, Kp)
    args = [xp] + [_pad2d(w, Kp, Np) for w in weights]
    if has_bias:
        args += [_pad2d(b.reshape(1, -1), 1, Np) for b in biases]

    grid = (Mp // tm, Np // tn, Kp // tk)
    kernel = functools.partial(_matmul_kernel, n_out=n_out,
                               has_bias=has_bias, activation=activation)

    in_specs = [pl.BlockSpec((tm, tk), lambda i, j, k: (i, k))]
    in_specs += [pl.BlockSpec((tk, tn), lambda i, j, k: (k, j))
                 for _ in range(n_out)]
    if has_bias:
        in_specs += [pl.BlockSpec((1, tn), lambda i, j, k: (0, j))
                     for _ in range(n_out)]
    out_specs = [pl.BlockSpec((tm, tn), lambda i, j, k: (i, j))
                 for _ in range(n_out)]
    out_shape = tuple(jax.ShapeDtypeStruct((Mp, Np), x.dtype)
                      for _ in range(n_out))
    scratch = [pltpu.VMEM((tm, tn), jnp.float32) for _ in range(n_out)]

    itemsize = jnp.dtype(x.dtype).itemsize
    cost = pl.CostEstimate(
        flops=2 * M * N * K * n_out + (8 * M * N if activation == "gelu" else 0),
        transcendentals=(M * N if activation == "gelu" else 0),
        bytes_accessed=itemsize * (M * K + n_out * (K * N + M * N)),
    )

    outs = pl.pallas_call(
        kernel,
        out_shape=out_shape,
        grid_spec=pltpu.PrefetchScalarGridSpec(
            num_scalar_prefetch=0,
            grid=grid,
            in_specs=in_specs,
            out_specs=out_specs,
            scratch_shapes=scratch,
        ),
        compiler_params=pltpu.CompilerParams(
            dimension_semantics=("parallel", "parallel", "arbitrary"),
            vmem_limit_bytes=_VMEM_LIMIT,
        ),
        cost_estimate=cost,
    )(*args)

    if Mp != M or Np != N:
        outs = tuple(o[:M, :N] for o in outs)
    return outs


def matmul_pallas(x, w, b=None, activation=None):
    # TODO(synk): bf16 operand casting (f32 accumulate) and
    # pipeline_mode=pl.Buffered(3) on the LM-head weight spec are further perf
    # knobs, omitted here to keep the strict f32 reference tolerance.
    return fused_matmul_pallas(x, [w], None if b is None else [b], activation)[0]


# ---------------------------------------------------------------------------
# LayerNorm and fused (residual-add + LayerNorm)
# ---------------------------------------------------------------------------
def _layernorm_kernel(x_ref, scale_ref, shift_ref, o_ref, *, eps):
    x = x_ref[...].astype(jnp.float32)
    mean = jnp.mean(x, axis=-1, keepdims=True)
    var = jnp.mean((x - mean) * (x - mean), axis=-1, keepdims=True)
    norm = (x - mean) * jax.lax.rsqrt(var + eps)
    out = norm * scale_ref[...].astype(jnp.float32) + shift_ref[...].astype(jnp.float32)
    o_ref[...] = out.astype(o_ref.dtype)


def _add_layernorm_kernel(res_ref, delta_ref, scale_ref, shift_ref,
                          newres_ref, norm_ref, *, eps):
    x = res_ref[...].astype(jnp.float32) + delta_ref[...].astype(jnp.float32)
    newres_ref[...] = x.astype(newres_ref.dtype)
    mean = jnp.mean(x, axis=-1, keepdims=True)
    var = jnp.mean((x - mean) * (x - mean), axis=-1, keepdims=True)
    norm = (x - mean) * jax.lax.rsqrt(var + eps)
    out = norm * scale_ref[...].astype(jnp.float32) + shift_ref[...].astype(jnp.float32)
    norm_ref[...] = out.astype(norm_ref.dtype)


def layernorm_pallas(x2d, scale, shift, *, eps=1e-5):
    R, D = x2d.shape
    tm, Rp = _tile_for(R, _LN_ROWS_TGT, 8)
    xp = _pad2d(x2d, Rp, D)
    kernel = functools.partial(_layernorm_kernel, eps=eps)
    out = pl.pallas_call(
        kernel,
        out_shape=jax.ShapeDtypeStruct((Rp, D), x2d.dtype),
        grid_spec=pltpu.PrefetchScalarGridSpec(
            num_scalar_prefetch=0,
            grid=(Rp // tm,),
            in_specs=[
                pl.BlockSpec((tm, D), lambda i: (i, 0)),
                pl.BlockSpec((1, D), lambda i: (0, 0)),
                pl.BlockSpec((1, D), lambda i: (0, 0)),
            ],
            out_specs=pl.BlockSpec((tm, D), lambda i: (i, 0)),
        ),
        compiler_params=pltpu.CompilerParams(
            dimension_semantics=("parallel",),
            vmem_limit_bytes=_VMEM_LIMIT,
        ),
    )(xp, scale.reshape(1, D), shift.reshape(1, D))
    return out[:R] if Rp != R else out


def add_layernorm_pallas(res2d, delta2d, scale, shift, *, eps=1e-5):
    """new_res = res + delta ; normed = LayerNorm(new_res).  Both returned."""
    R, D = res2d.shape
    tm, Rp = _tile_for(R, _LN_ROWS_TGT, 8)
    rp = _pad2d(res2d, Rp, D)
    dp = _pad2d(delta2d, Rp, D)
    kernel = functools.partial(_add_layernorm_kernel, eps=eps)
    row_spec = pl.BlockSpec((tm, D), lambda i: (i, 0))
    vec_spec = pl.BlockSpec((1, D), lambda i: (0, 0))
    new_res, normed = pl.pallas_call(
        kernel,
        out_shape=(jax.ShapeDtypeStruct((Rp, D), res2d.dtype),
                   jax.ShapeDtypeStruct((Rp, D), res2d.dtype)),
        grid_spec=pltpu.PrefetchScalarGridSpec(
            num_scalar_prefetch=0,
            grid=(Rp // tm,),
            in_specs=[row_spec, row_spec, vec_spec, vec_spec],
            out_specs=[row_spec, row_spec],
        ),
        compiler_params=pltpu.CompilerParams(
            dimension_semantics=("parallel",),
            vmem_limit_bytes=_VMEM_LIMIT,
        ),
    )(rp, dp, scale.reshape(1, D), shift.reshape(1, D))
    if Rp != R:
        new_res, normed = new_res[:R], normed[:R]
    return new_res, normed


# ---------------------------------------------------------------------------
# Flash-style causal multi-head attention in merged-head (B, T, D) layout
# ---------------------------------------------------------------------------
def _flash_attn_kernel(q_ref, k_ref, v_ref, o_ref, m_ref, l_ref, acc_ref,
                       *, n_heads, head_dim, scale, tq, tkv):
    qi = pl.program_id(1)
    kv = pl.program_id(2)

    @pl.when(kv == 0)
    def _():
        m_ref[...] = jnp.full_like(m_ref, -jnp.inf)
        l_ref[...] = jnp.zeros_like(l_ref)
        acc_ref[...] = jnp.zeros_like(acc_ref)

    # Causal tile skipping: this KV tile contributes only if its first column
    # index is <= the last row index of the current Q tile.
    @pl.when(kv * tkv <= qi * tq + (tq - 1))
    def _():
        rows = qi * tq + jax.lax.broadcasted_iota(jnp.int32, (tq, tkv), 0)
        cols = kv * tkv + jax.lax.broadcasted_iota(jnp.int32, (tq, tkv), 1)
        masked = cols > rows

        # Scale folded into q (tq*D VALU mults instead of tq*tkv per head).
        q_all = q_ref[0].astype(jnp.float32) * scale
        k_all = k_ref[0].astype(jnp.float32)
        v_all = v_ref[0].astype(jnp.float32)

        for h in range(n_heads):                      # static loop over heads
            lo, hi = h * head_dim, (h + 1) * head_dim
            s = jax.lax.dot_general(
                q_all[:, lo:hi], k_all[:, lo:hi],
                (((1,), (1,)), ((), ())),
                preferred_element_type=jnp.float32)    # (tq, tkv)
            s = jnp.where(masked, -jnp.inf, s)

            m_prev = m_ref[h]                          # (tq, 1)
            m_new = jnp.maximum(m_prev, jnp.max(s, axis=-1, keepdims=True))
            alpha = jnp.exp(m_prev - m_new)
            p = jnp.exp(s - m_new)
            l_ref[h] = alpha * l_ref[h] + jnp.sum(p, axis=-1, keepdims=True)
            acc_ref[:, lo:hi] = alpha * acc_ref[:, lo:hi] + jnp.dot(
                p, v_all[:, lo:hi], preferred_element_type=jnp.float32)
            m_ref[h] = m_new

    @pl.when(kv == pl.num_programs(2) - 1)
    def _():
        for h in range(n_heads):
            lo, hi = h * head_dim, (h + 1) * head_dim
            inv = pl.reciprocal(l_ref[h], approx=False)
            o_ref[0, :, lo:hi] = (acc_ref[:, lo:hi] * inv).astype(o_ref.dtype)


def causal_attention_pallas(q, k, v, n_heads):
    """q, k, v, output: (B, T, D) in merged-head layout (head h = columns
    [h*Dh, (h+1)*Dh)).  No split/merge-head transposes are needed around it."""
    B, T, D = q.shape
    Dh = D // n_heads
    scale = 1.0 / math.sqrt(Dh)

    if T <= _ATTN_T_TILE:
        tq = tkv = T
        Tp = T
    else:
        tq = tkv = _ATTN_T_TILE
        Tp = _round_up(T, _ATTN_T_TILE)
    if Tp != T:
        # Padded KV rows have column index >= T and are always behind the
        # causal mask for real rows; padded Q rows are sliced off below.
        pad = ((0, 0), (0, Tp - T), (0, 0))
        q, k, v = jnp.pad(q, pad), jnp.pad(k, pad), jnp.pad(v, pad)

    kernel = functools.partial(_flash_attn_kernel, n_heads=n_heads,
                               head_dim=Dh, scale=scale, tq=tq, tkv=tkv)
    q_spec = pl.BlockSpec((1, tq, D), lambda b, qi, kv: (b, qi, 0))
    kv_spec = pl.BlockSpec((1, tkv, D), lambda b, qi, kv: (b, kv, 0))

    out = pl.pallas_call(
        kernel,
        out_shape=jax.ShapeDtypeStruct((B, Tp, D), q.dtype),
        grid_spec=pltpu.PrefetchScalarGridSpec(
            num_scalar_prefetch=0,
            grid=(B, Tp // tq, Tp // tkv),
            in_specs=[q_spec, kv_spec, kv_spec],
            out_specs=q_spec,
            scratch_shapes=[
                pltpu.VMEM((n_heads, tq, 1), jnp.float32),   # running max  m
                pltpu.VMEM((n_heads, tq, 1), jnp.float32),   # running sum  l
                pltpu.VMEM((tq, D), jnp.float32),            # output accumulator
            ],
        ),
        compiler_params=pltpu.CompilerParams(
            dimension_semantics=("parallel", "parallel", "arbitrary"),
            vmem_limit_bytes=_VMEM_LIMIT,
        ),
    )(q, k, v)
    return out[:, :T, :] if Tp != T else out


# ---------------------------------------------------------------------------
# GPT model (Pallas forward)
# ---------------------------------------------------------------------------
def gpt_forward_pallas(params, in_idx, cfg):
    B, T = in_idx.shape
    D, H, V = cfg["emb_dim"], cfg["n_heads"], cfg["vocab_size"]
    n_layers = cfg["n_layers"]

    # TODO(synk): token/position embedding gather stays in plain JAX (no clean
    # Pallas win at this scale); drop_emb / drop_shortcut / attn-dropout are
    # identity (inference semantics, drop_rate = 0).
    x = jnp.take(params["tok_emb"], in_idx, axis=0) + params["pos_emb"][:T][None]

    res = x.reshape(B * T, D)                     # running residual stream
    blk0 = params["blocks"][0]
    h = layernorm_pallas(res, blk0["norm1"]["scale"], blk0["norm1"]["shift"])

    for li in range(n_layers):
        p = params["blocks"][li]

        # --- attention sub-block (fused QKV, merged-head layout throughout) ---
        q, k, v = fused_matmul_pallas(
            h, [p["att"]["wq"], p["att"]["wk"], p["att"]["wv"]])
        ctx = causal_attention_pallas(q.reshape(B, T, D), k.reshape(B, T, D),
                                      v.reshape(B, T, D), H)
        attn_out = matmul_pallas(ctx.reshape(B * T, D),
                                 p["att"]["wo"], p["att"]["bo"])
        # residual add fused into the following LayerNorm
        res, h = add_layernorm_pallas(res, attn_out,
                                      p["norm2"]["scale"], p["norm2"]["shift"])

        # --- feed-forward sub-block (GELU fused into up-projection epilogue) ---
        f = matmul_pallas(h, p["ff"]["w1"], p["ff"]["b1"], activation="gelu")
        f = matmul_pallas(f, p["ff"]["w2"], p["ff"]["b2"])
        nxt = (params["blocks"][li + 1]["norm1"] if li + 1 < n_layers
               else params["final_norm"])
        res, h = add_layernorm_pallas(res, f, nxt["scale"], nxt["shift"])

    logits = matmul_pallas(h, params["out_head_w"], None)   # no-bias variant
    return logits.reshape(B, T, V)


# ---------------------------------------------------------------------------
# Pure-JAX reference (mirrors the PyTorch module)
# ---------------------------------------------------------------------------
def _gelu_ref(x):
    return 0.5 * x * (1.0 + jnp.tanh(_SQRT_2_OVER_PI * (x + 0.044715 * x ** 3)))


def _layernorm_ref(x, scale, shift, eps=1e-5):
    mean = jnp.mean(x, axis=-1, keepdims=True)
    var = jnp.mean((x - mean) ** 2, axis=-1, keepdims=True)
    return scale * (x - mean) / jnp.sqrt(var + eps) + shift


def gpt_forward_ref(params, in_idx, cfg):
    B, T = in_idx.shape
    D, H = cfg["emb_dim"], cfg["n_heads"]
    Dh = D // H
    x = jnp.take(params["tok_emb"], in_idx, axis=0) + params["pos_emb"][:T][None]
    for p in params["blocks"]:
        sc = x
        h = _layernorm_ref(x, p["norm1"]["scale"], p["norm1"]["shift"])
        q, k, v = h @ p["att"]["wq"], h @ p["att"]["wk"], h @ p["att"]["wv"]

        def split(t):
            return t.reshape(B, T, H, Dh).transpose(0, 2, 1, 3)

        qh, kh, vh = split(q), split(k), split(v)
        s = jnp.einsum("bhqd,bhkd->bhqk", qh, kh)
        mask = jnp.triu(jnp.ones((T, T), dtype=bool), k=1)
        s = jnp.where(mask, -jnp.inf, s) / math.sqrt(Dh)
        w = jax.nn.softmax(s, axis=-1)
        ctx = jnp.einsum("bhqk,bhkd->bhqd", w, vh).transpose(0, 2, 1, 3).reshape(B, T, D)
        x = sc + (ctx @ p["att"]["wo"] + p["att"]["bo"])

        sc = x
        h = _layernorm_ref(x, p["norm2"]["scale"], p["norm2"]["shift"])
        h = _gelu_ref(h @ p["ff"]["w1"] + p["ff"]["b1"])
        x = sc + (h @ p["ff"]["w2"] + p["ff"]["b2"])
    x = _layernorm_ref(x, params["final_norm"]["scale"], params["final_norm"]["shift"])
    return x @ params["out_head_w"]


# ---------------------------------------------------------------------------
# Parameter init
# ---------------------------------------------------------------------------
def init_params(key, cfg, std=0.1):
    D, V, C = cfg["emb_dim"], cfg["vocab_size"], cfg["context_length"]
    H4 = 4 * D
    keys = jax.random.split(key, 3 + cfg["n_layers"])

    def rnd(k, shape):
        return std * jax.random.normal(k, shape, dtype=jnp.float32)

    params = {
        "tok_emb": rnd(keys[0], (V, D)),
        "pos_emb": rnd(keys[1], (C, D)),
        "out_head_w": rnd(keys[2], (D, V)),
        "final_norm": {"scale": jnp.ones((D,), jnp.float32),
                       "shift": jnp.zeros((D,), jnp.float32)},
        "blocks": [],
    }
    for l in range(cfg["n_layers"]):
        k = jax.random.split(keys[3 + l], 12)
        blk = {
            "norm1": {"scale": 1.0 + 0.1 * jax.random.normal(k[8], (D,), jnp.float32),
                      "shift": 0.1 * jax.random.normal(k[9], (D,), jnp.float32)},
            "norm2": {"scale": 1.0 + 0.1 * jax.random.normal(k[10], (D,), jnp.float32),
                      "shift": 0.1 * jax.random.normal(k[11], (D,), jnp.float32)},
            "att": {
                "wq": rnd(k[0], (D, D)), "wk": rnd(k[1], (D, D)),
                "wv": rnd(k[2], (D, D)), "wo": rnd(k[3], (D, D)),
                "bo": rnd(k[4], (D,)),
            },
            "ff": {
                "w1": rnd(k[5], (D, H4)), "b1": rnd(k[6], (H4,)),
                "w2": rnd(k[7], (H4, D)), "b2": jnp.zeros((D,), jnp.float32),
            },
        }
        params["blocks"].append(blk)
    return params


if __name__ == "__main__":
    cfg = dict(vocab_size=100, context_length=16, emb_dim=32, n_heads=4,
               n_layers=2, drop_rate=0.0, qkv_bias=False)

    key = jax.random.PRNGKey(0)
    pkey, dkey = jax.random.split(key)
    params = init_params(pkey, cfg)

    batch, seq = 2, 8
    in_idx = jax.random.randint(dkey, (batch, seq), 0, cfg["vocab_size"], dtype=jnp.int32)

    logits = gpt_forward_pallas(params, in_idx, cfg)
    logits = jax.block_until_ready(logits)

    with jax.default_matmul_precision("highest"):
        expected = jax.block_until_ready(gpt_forward_ref(params, in_idx, cfg))

    assert logits.shape == (batch, seq, cfg["vocab_size"])
    assert bool(jnp.allclose(logits, expected, atol=1e-3, rtol=1e-3)), \
        "Pallas GPT forward mismatch vs JAX reference"
    print("KERNEL_OK")
</pallas_src>

<mosaic_0001>
module attributes {stable_mosaic.version = 11 : i64} {
  func.func @_layernorm_kernel(%arg0: i32, %arg1: memref<16x32xf32, #tpu.memory_space<vmem>>, %arg2: memref<1x32xf32, #tpu.memory_space<vmem>>, %arg3: memref<1x32xf32, #tpu.memory_space<vmem>>, %arg4: memref<16x32xf32, #tpu.memory_space<vmem>>) attributes {dimension_semantics = [#tpu.dimension_semantics<parallel>], iteration_bounds = array<i64: 1>, scalar_prefetch = 0 : i64, scratch_operands = 0 : i64, tpu.core_type = #tpu.core_type<tc>, window_params = [{transform_indices = @transform_0, window_bounds = array<i64: 16, 32>}, {pipeline_mode = #tpu.pipeline_mode<synchronous>, transform_indices = @transform_1, window_bounds = array<i64: 1, 32>}, {pipeline_mode = #tpu.pipeline_mode<synchronous>, transform_indices = @transform_2, window_bounds = array<i64: 1, 32>}, {transform_indices = @transform_3, window_bounds = array<i64: 16, 32>}]} {
    %c0 = arith.constant 0 : index
    %c0_0 = arith.constant 0 : index
    %0 = vector.load %arg1[%c0, %c0_0] : memref<16x32xf32, #tpu.memory_space<vmem>>, vector<16x32xf32>
    %cst = arith.constant dense<0.000000e+00> : vector<16xf32>
    %1 = vector.multi_reduction <add>, %0, %cst [1] : vector<16x32xf32> to vector<16xf32>
    %2 = vector.shape_cast %1 : vector<16xf32> to vector<16x1xf32>
    %cst_1 = arith.constant 3.200000e+01 : f32
    %3 = vector.broadcast %cst_1 : f32 to vector<16x1xf32>
    %4 = arith.divf %2, %3 : vector<16x1xf32>
    %5 = vector.broadcast %4 : vector<16x1xf32> to vector<16x32xf32>
    %6 = arith.subf %0, %5 : vector<16x32xf32>
    %7 = vector.broadcast %4 : vector<16x1xf32> to vector<16x32xf32>
    %8 = arith.subf %0, %7 : vector<16x32xf32>
    %9 = arith.mulf %6, %8 : vector<16x32xf32>
    %cst_2 = arith.constant dense<0.000000e+00> : vector<16xf32>
    %10 = vector.multi_reduction <add>, %9, %cst_2 [1] : vector<16x32xf32> to vector<16xf32>
    %11 = vector.shape_cast %10 : vector<16xf32> to vector<16x1xf32>
    %cst_3 = arith.constant 3.200000e+01 : f32
    %12 = vector.broadcast %cst_3 : f32 to vector<16x1xf32>
    %13 = arith.divf %11, %12 : vector<16x1xf32>
    %14 = vector.broadcast %4 : vector<16x1xf32> to vector<16x32xf32>
    %15 = arith.subf %0, %14 : vector<16x32xf32>
    %cst_4 = arith.constant 9.99999974E-6 : f32
    %16 = vector.broadcast %cst_4 : f32 to vector<16x1xf32>
    %17 = arith.addf %13, %16 : vector<16x1xf32>
    %18 = math.rsqrt %17 : vector<16x1xf32>
    %19 = vector.broadcast %18 : vector<16x1xf32> to vector<16x32xf32>
    %20 = arith.mulf %15, %19 : vector<16x32xf32>
    %c0_5 = arith.constant 0 : index
    %c0_6 = arith.constant 0 : index
    %21 = vector.load %arg2[%c0_5, %c0_6] : memref<1x32xf32, #tpu.memory_space<vmem>>, vector<1x32xf32>
    %22 = vector.broadcast %21 : vector<1x32xf32> to vector<16x32xf32>
    %23 = arith.mulf %20, %22 : vector<16x32xf32>
    %c0_7 = arith.constant 0 : index
    %c0_8 = arith.constant 0 : index
    %24 = vector.load %arg3[%c0_7, %c0_8] : memref<1x32xf32, #tpu.memory_space<vmem>>, vector<1x32xf32>
    %25 = vector.broadcast %24 : vector<1x32xf32> to vector<16x32xf32>
    %26 = arith.addf %23, %25 : vector<16x32xf32>
    %c0_9 = arith.constant 0 : index
    %c0_10 = arith.constant 0 : index
    %27 = vector.load %arg4[%c0_9, %c0_10] : memref<16x32xf32, #tpu.memory_space<vmem>>, vector<16x32xf32>
    tpu.vector_store %arg4[%c0_9, %c0_10], %26 {strides = array<i32>} : memref<16x32xf32, #tpu.memory_space<vmem>>, vector<16x32xf32>,
    return
  }
  func.func @transform_0(%arg0: i32) -> (i32, i32) {
    %c0_i32 = arith.constant 0 : i32
    %c0_i32_0 = arith.constant 0 : i32
    return %arg0, %c0_i32 : i32, i32
  }
  func.func @transform_1(%arg0: i32) -> (i32, i32) {
    %c0_i32 = arith.constant 0 : i32
    %c0_i32_0 = arith.constant 0 : i32
    %c0_i32_1 = arith.constant 0 : i32
    return %c0_i32, %c0_i32_0 : i32, i32
  }
  func.func @transform_2(%arg0: i32) -> (i32, i32) {
    %c0_i32 = arith.constant 0 : i32
    %c0_i32_0 = arith.constant 0 : i32
    %c0_i32_1 = arith.constant 0 : i32
    return %c0_i32, %c0_i32_0 : i32, i32
  }
  func.func @transform_3(%arg0: i32) -> (i32, i32) {
    %c0_i32 = arith.constant 0 : i32
    %c0_i32_0 = arith.constant 0 : i32
    return %arg0, %c0_i32 : i32, i32
  }
}

</mosaic_0001>

<llo_original>
// kernel: tpu_custom_call.1
$region0: #{tpu_custom_call.1}
  #allocation0 [shape = 'u32[]', space=smem, size = 0x4, offset = 0x4, fixed_abs, tag = 'smem constant byte address 0x4 - core index']
  #allocation1 [shape = 'u32[144,128]{1,0:T(1,128)}', space=vmem, size = 0x12000, scoped, tag = 'internal scratch']
  %s0 = inlined_call_operand.hbm [shape: f32[16,32], index: 0, kind: input, shape index: {}]
  %s1 = inlined_call_operand.vmem [shape: f32[1,32], index: 1, kind: input, shape index: {}]
  %s2 = inlined_call_operand.vmem [shape: f32[1,32], index: 2, kind: input, shape index: {}]
  %s3 = inlined_call_operand.hbm [shape: f32[16,32], index: 3, kind: output, shape index: {}]
  %s4 = sld [smem:[#allocation0]]
  $region26: #{tpu_custom_call.1} parent=0
    _
  %s6 = ssub.s32 1, %s4
  %s7 = scalar_select 0, %s6, %s4
  $region1: #{tpu_custom_call.1} parent=0
    #allocation2 [shape = 'u8[8192]{0}', space=vmem, size = 0x2000, scoped, tag = 'input window, operand 0, single buffered']
    #allocation3 [shape = 's32[1]{0}', space=sflag, size = 0x4, scoped, tag = 'scoped memory for tpu_custom_call.1']
    #allocation4 [shape = 's32[1]{0}', space=sflag, size = 0x4, scoped, tag = 'scoped memory for tpu_custom_call.1']
    #allocation5 [shape = 'u8[8192]{0}', space=vmem, size = 0x2000, scoped, tag = 'output window, operand 0, single buffered']
    %8 = vsyncpa [#allocation3], 0
    %9 = vsyncpa [#allocation4], 0
    // Predicated region
    $region2: #{tpu_custom_call.1} parent=1 // pred_check
      _
    $region3: #{tpu_custom_call.1} parent=1 // pred_check_branch
      %11 = sbr.rel (0) target = $region5
    $region4: #{tpu_custom_call.1} parent=1 // pred_region
      %s13 = ssub.s32 256, 256
      %14 = vsyncadd [#allocation3], %s13
      %s15 = sshll.u32 [#allocation2], 4
      %s16 = int_to_ptr.vmem [resolvable:$true] %s15
      %21 = dma.hbm_to_vmem [thread:$0]  %s0, 256, %s16, [#allocation3], 128, 128, 8
    $region5: #{tpu_custom_call.1} parent=1 // pred_fallthru
      _
    // Predicated region
    $region6: #{tpu_custom_call.1} parent=1 // pred_check
      _
    $region7: #{tpu_custom_call.1} parent=1 // pred_check_branch
      %23 = sbr.rel (0) target = $region9
    $region8: #{tpu_custom_call.1} parent=1 // pred_region
      _
    $region9: #{tpu_custom_call.1} parent=1 // pred_fallthru
      _
    // Predicated region
    $region10: #{tpu_custom_call.1} parent=1 // pred_check
      _
    $region11: #{tpu_custom_call.1} parent=1 // pred_check_branch
      %25 = sbr.rel (0) target = $region13
    $region12: #{tpu_custom_call.1} parent=1 // pred_region
      _
    $region13: #{tpu_custom_call.1} parent=1 // pred_fallthru
      _
    // Predicated region
    $region14: #{tpu_custom_call.1} parent=1 // pred_check
      _
    $region15: #{tpu_custom_call.1} parent=1 // pred_check_branch
      %27 = sbr.rel (0) target = $region17
    $region16: #{tpu_custom_call.1} parent=1 // pred_region
      %28 = dma.done [#allocation3], 256
    $region17: #{tpu_custom_call.1} parent=1 // pred_fallthru
      _
    %v29 = vld [vmem:[#allocation2] sm:$0xff]
    %v30 = vld [vmem:[#allocation2 + $0x8] sm:$0xff]
    %vm31 = vcmask 261120
    %v32 = vsel %vm31, %v29, 0.0
    %33 = vadd.xlane.f32.xlu0 %v32
    %v34 = vpop.xlane.xlu0 %33
    %v35 = vsel %vm31, %v30, 0.0
    %36 = vadd.xlane.f32.xlu0 %v35
    %v37 = vpop.xlane.xlu0 %36
    %v38 = vrcp.pop 32.0
    %v39 = vmul.f32 %v34, %v38
    %v40 = vmul.f32 %v37, %v38
    %v41 = vsub.f32 %v29, %v39
    %v42 = vsub.f32 %v30, %v40
    %v43 = vmul.f32 %v41, %v41
    %v44 = vmul.f32 %v42, %v42
    %v45 = vsel %vm31, %v43, 0.0
    %46 = vadd.xlane.f32.xlu0 %v45
    %v47 = vpop.xlane.xlu0 %46
    %v48 = vsel %vm31, %v44, 0.0
    %49 = vadd.xlane.f32.xlu0 %v48
    %v50 = vpop.xlane.xlu0 %49
    %v51 = vmul.f32 %v47, %v38
    %v52 = vmul.f32 %v50, %v38
    %v53 = vadd.f32 %v51, 1e-05
    %v54 = vadd.f32 %v52, 1e-05
    %v55 = vrsqrt.pop %v53
    %v56 = vrsqrt.pop %v54
    %v57 = vmul.f32 %v41, %v55
    %v58 = vmul.f32 %v42, %v56
    %v59 = vld [vmem:[%s1] sm:$0x1]
    %v61 = vlaneseq
    %v62 = vshrl.u32 %v61, 7
    %v63 = vsub.s32 0, %v62
    %v64 = vrot.slane %v59, %v63
    %v66 = vmul.f32 %v57, %v64
    %v67 = vmul.f32 %v58, %v64
    %v68 = vld [vmem:[%s2] sm:$0x1]
    %v70 = vlaneseq
    %v71 = vshrl.u32 %v70, 7
    %v72 = vsub.s32 0, %v71
    %v73 = vrot.slane %v68, %v72
    %v75 = vadd.f32 %v66, %v73
    %v76 = vadd.f32 %v67, %v73
    %77 = vst.msk [vmem:[#allocation5] sm:$0xff] %vm31, %v75
    %78 = vst.msk [vmem:[#allocation5 + $0x8] sm:$0xff] %vm31, %v76
    // Predicated region
    $region18: #{tpu_custom_call.1} parent=1 // pred_check
      _
    $region19: #{tpu_custom_call.1} parent=1 // pred_check_branch
      %80 = sbr.rel (0) target = $region21
    $region20: #{tpu_custom_call.1} parent=1 // pred_region
      %s82 = ssub.s32 256, 256
      %83 = vsyncadd [#allocation4], %s82
      %s84 = sshll.u32 [#allocation5], 4
      %s85 = int_to_ptr.vmem [resolvable:$true] %s84
      %90 = dma.vmem_to_hbm [thread:$0]  %s85, 256, %s3, [#allocation4], 128, 128, 8
    $region21: #{tpu_custom_call.1} parent=1 // pred_fallthru
      _
    // Predicated region
    $region22: #{tpu_custom_call.1} parent=1 // pred_check
      _
    $region23: #{tpu_custom_call.1} parent=1 // pred_check_branch
      %92 = sbr.rel (0) target = $region25
    $region24: #{tpu_custom_call.1} parent=1 // pred_region
      %93 = dma.done [#allocation4], 256
    $region25: #{tpu_custom_call.1} parent=1 // pred_fallthru
      _
    %94 = vsyncpa [#allocation3], 1
    %95 = vsyncpa [#allocation4], 1

</llo_original>
